<compile_context>
chip_gen: v5e
topology: v5e:2x2
jax: 0.10.0
libtpu: 0.0.40
codegen_flags: <defaults>
</compile_context>

<pallas_src>
import functools

import numpy as np
import jax
import jax.numpy as jnp
from jax import lax
from jax.experimental import pallas as pl
from jax.experimental.pallas import tpu as pltpu

H, W = 4, 9
IN_CH = 2
IN_RAW = IN_CH * H * W      # 72
OUT_RAW = 36
LANE = 128


def _round_up(n, m):
    return ((n + m - 1) // m) * m


# -----------------------------------------------------------------------------
# Kernel: x -> relu(conv1) -> [relu(conv_h)]* -> fc, all as lane-dense matmuls.
# -----------------------------------------------------------------------------
def _cnn_kernel(num_hidden, *refs):
    if num_hidden > 0:
        x_ref, w1_ref, b1_ref, wh_ref, bh_ref, wfc_ref, bfc_ref, o_ref = refs
    else:
        x_ref, w1_ref, b1_ref, wfc_ref, bfc_ref, o_ref = refs
        wh_ref = bh_ref = None

    x = x_ref[...]                                               # bf16 (TB, IN_PAD)

    # conv1 (as dense matmul) + bias + relu, f32 accumulation on the MXU.
    h = jnp.dot(x, w1_ref[...], preferred_element_type=jnp.float32)
    h = jnp.maximum(h + b1_ref[...], 0.0)                        # f32 (TB, HID_PAD)

    # hidden convs (as dense matmuls) + bias + relu; static Python unroll,
    # static slices into the stacked weight/bias arrays.
    for i in range(num_hidden):
        z = jnp.dot(h.astype(jnp.bfloat16), wh_ref[i],
                    preferred_element_type=jnp.float32)
        h = jnp.maximum(z + bh_ref[i:i + 1, :], 0.0)

    # fc (no activation) -- lane-dense (TB, OUT_PAD) store.
    y = jnp.dot(h.astype(jnp.bfloat16), wfc_ref[...],
                preferred_element_type=jnp.float32)
    o_ref[...] = y + bfc_ref[...]                                # f32 (TB, OUT_PAD)


# -----------------------------------------------------------------------------
# Parameter preprocessing (one-time, host side)
# -----------------------------------------------------------------------------
def _conv_as_matrix(w_np, pad):
    """Dense M such that flatten(conv2d(x, w, stride=1, padding=pad)) ==
    flatten(x) @ M, for fixed spatial size (H, W) and NCHW flatten order."""
    c_out, c_in, kh_sz, kw_sz = w_np.shape
    M = np.zeros((c_in * H * W, c_out * H * W), np.float32)
    for co in range(c_out):
        for ci in range(c_in):
            for kh in range(kh_sz):
                for kw in range(kw_sz):
                    v = w_np[co, ci, kh, kw]
                    for ho in range(H):
                        hi = ho + kh - pad
                        if not (0 <= hi < H):
                            continue
                        for wo in range(W):
                            wi = wo + kw - pad
                            if not (0 <= wi < W):
                                continue
                            M[(ci * H + hi) * W + wi,
                              (co * H + ho) * W + wo] += v
    return M


def prepare_params(params, *, pad=1):
    """Conv weights -> dense matrices, lane-pad, pack, cast matmul operands to bf16."""
    conv_ws = [np.asarray(w, np.float32) for w in params["conv_w"]]
    conv_bs = [np.asarray(b, np.float32) for b in params["conv_b"]]
    fc_w = np.asarray(params["fc_w"], np.float32)          # (36, HID_RAW)
    fc_b = np.asarray(params["fc_b"], np.float32)          # (36,)

    num_filters = conv_ws[0].shape[0]
    hid_raw = num_filters * H * W
    in_pad = _round_up(IN_RAW, LANE)
    hid_pad = _round_up(hid_raw, LANE)
    out_pad = _round_up(OUT_RAW, LANE)
    num_hidden = len(conv_ws) - 1

    def pad2(m, r, c):
        out = np.zeros((r, c), np.float32)
        out[:m.shape[0], :m.shape[1]] = m
        return out

    m1 = pad2(_conv_as_matrix(conv_ws[0], pad), in_pad, hid_pad)
    b1 = pad2(np.repeat(conv_bs[0], H * W)[None, :], 1, hid_pad)

    packed = {
        "w1": jnp.asarray(m1, jnp.bfloat16),
        "b1": jnp.asarray(b1, jnp.float32),
        "wfc": jnp.asarray(pad2(fc_w.T, hid_pad, out_pad), jnp.bfloat16),
        "bfc": jnp.asarray(pad2(fc_b[None, :], 1, out_pad), jnp.float32),
        "num_hidden": num_hidden,
        "in_pad": in_pad, "hid_pad": hid_pad, "out_pad": out_pad,
    }
    if num_hidden > 0:
        wh = np.stack([pad2(_conv_as_matrix(w, pad), hid_pad, hid_pad)
                       for w in conv_ws[1:]])
        bh = np.stack([pad2(np.repeat(b, H * W)[None, :], 1, hid_pad)[0]
                       for b in conv_bs[1:]])
        packed["wh"] = jnp.asarray(wh, jnp.bfloat16)
        packed["bh"] = jnp.asarray(bh, jnp.float32)
    return packed


# -----------------------------------------------------------------------------
# Wrapper
# -----------------------------------------------------------------------------
def cnn_forward(x_nchw, packed):
    B = x_nchw.shape[0]
    num_hidden = packed["num_hidden"]
    in_pad = packed["in_pad"]
    hid_pad = packed["hid_pad"]
    out_pad = packed["out_pad"]

    # Batch tile: lane/sublane-friendly tiles for real batches so the pipeline
    # and (on multi-TC parts) both TensorCores engage; one sublane-rounded
    # tile for toy batches.
    if B >= 2048:
        tb = 512
    elif B >= 512:
        tb = 256
    elif B >= 128:
        tb = 128
    else:
        tb = _round_up(B, 8)
    b_pad = _round_up(B, tb)

    x_flat = x_nchw.reshape(B, IN_RAW)
    x_p = jnp.pad(x_flat, ((0, b_pad - B), (0, in_pad - IN_RAW)))
    x_p = x_p.astype(jnp.bfloat16)

    flat_params = [packed["w1"], packed["b1"]]
    if num_hidden > 0:
        flat_params += [packed["wh"], packed["bh"]]
    flat_params += [packed["wfc"], packed["bfc"]]

    def full_spec(a):
        # Whole array as one block; constant block index across the grid, so
        # the weights stay resident in VMEM (no re-DMA per batch tile).
        zeros = (0,) * a.ndim
        return pl.BlockSpec(a.shape, lambda i, _z=zeros: _z)

    in_specs = [pl.BlockSpec((tb, in_pad), lambda i: (i, 0))]
    in_specs += [full_spec(a) for a in flat_params]

    flops = 2 * b_pad * (in_pad * hid_pad
                         + num_hidden * hid_pad * hid_pad
                         + hid_pad * out_pad)
    param_bytes = sum(int(a.size) * a.dtype.itemsize for a in flat_params)
    bytes_accessed = (int(x_p.size) * 2 + param_bytes + b_pad * out_pad * 4)

    # Only raise the scoped VMEM limit if the packed weights would not fit the
    # default (~32 MiB) budget together with the double-buffered batch tiles.
    tile_bytes = 2 * (tb * in_pad * 2 + tb * out_pad * 4)
    needed = param_bytes * 2 + tile_bytes + (1 << 20)
    vmem_limit = None if needed <= (32 << 20) else min(64 << 20, needed)

    compiler_params = pltpu.CompilerParams(
        dimension_semantics=("parallel",),
        vmem_limit_bytes=vmem_limit,
    )

    out = pl.pallas_call(
        functools.partial(_cnn_kernel, num_hidden),
        out_shape=jax.ShapeDtypeStruct((b_pad, out_pad), jnp.float32),
        grid=(b_pad // tb,),
        in_specs=in_specs,
        out_specs=pl.BlockSpec((tb, out_pad), lambda i: (i, 0)),
        compiler_params=compiler_params,
        cost_estimate=pl.CostEstimate(flops=flops, transcendentals=0,
                                      bytes_accessed=bytes_accessed),
    )(x_p, *flat_params)

    return out[:B, :OUT_RAW]


# -----------------------------------------------------------------------------
# Pure-JAX reference (matches the PyTorch forward) and PyTorch-style init
# -----------------------------------------------------------------------------
def cnn_ref(x_nchw, params, *, pad=1):
    h = x_nchw
    for w, b in zip(params["conv_w"], params["conv_b"]):
        h = lax.conv_general_dilated(h, w, window_strides=(1, 1),
                                     padding=((pad, pad), (pad, pad)),
                                     dimension_numbers=("NCHW", "OIHW", "NCHW"))
        h = jax.nn.relu(h + b.reshape(1, -1, 1, 1))
    B = x_nchw.shape[0]
    h = h.reshape(B, -1)
    return h @ params["fc_w"].T + params["fc_b"]


def init_params(key, num_layers=1, num_filters=4, filter_size=3):
    def uniform(k, shape, fan_in):
        bound = 1.0 / np.sqrt(fan_in)
        return jax.random.uniform(k, shape, jnp.float32, -bound, bound)

    keys = jax.random.split(key, 2 * (num_layers + 1))
    conv_w, conv_b = [], []
    in_ch = IN_CH
    for i in range(num_layers):
        fan_in = in_ch * filter_size * filter_size
        conv_w.append(uniform(keys[2 * i],
                              (num_filters, in_ch, filter_size, filter_size),
                              fan_in))
        conv_b.append(uniform(keys[2 * i + 1], (num_filters,), fan_in))
        in_ch = num_filters
    hid = num_filters * H * W
    fc_w = uniform(keys[-2], (OUT_RAW, hid), hid)
    fc_b = uniform(keys[-1], (OUT_RAW,), hid)
    return {"conv_w": conv_w, "conv_b": conv_b, "fc_w": fc_w, "fc_b": fc_b}


if __name__ == "__main__":
    num_layers, num_filters = 2, 4      # conv1 + 1 hidden conv + fc
    B = 8

    key = jax.random.PRNGKey(0)
    kx, kp = jax.random.split(key)
    x = jax.random.normal(kx, (B, IN_CH, H, W), dtype=jnp.float32)
    params = init_params(kp, num_layers=num_layers, num_filters=num_filters)

    packed = prepare_params(params, pad=1)
    fwd = jax.jit(lambda xx: cnn_forward(xx, packed))
    out = jax.block_until_ready(fwd(x))

    ref = cnn_ref(x, params, pad=1)
    assert out.shape == (B, OUT_RAW), out.shape
    max_err = float(jnp.max(jnp.abs(out - ref)))
    assert bool(jnp.allclose(out, ref, rtol=2e-2, atol=1e-1)), (
        f"mismatch vs reference: max abs err = {max_err}")

    print("KERNEL_OK")
</pallas_src>

<mosaic_0001>
module attributes {stable_mosaic.version = 11 : i64} {
  func.func @_cnn_kernel(%arg0: i32, %arg1: memref<8x128xbf16, #tpu.memory_space<vmem>>, %arg2: memref<128x256xbf16, #tpu.memory_space<vmem>>, %arg3: memref<1x256xf32, #tpu.memory_space<vmem>>, %arg4: memref<1x256x256xbf16, #tpu.memory_space<vmem>>, %arg5: memref<1x256xf32, #tpu.memory_space<vmem>>, %arg6: memref<256x128xbf16, #tpu.memory_space<vmem>>, %arg7: memref<1x128xf32, #tpu.memory_space<vmem>>, %arg8: memref<8x128xf32, #tpu.memory_space<vmem>>) attributes {dimension_semantics = [#tpu.dimension_semantics<parallel>], iteration_bounds = array<i64: 1>, scalar_prefetch = 0 : i64, scratch_operands = 0 : i64, tpu.core_type = #tpu.core_type<tc>, window_params = [{transform_indices = @transform_0, window_bounds = array<i64: 8, 128>}, {pipeline_mode = #tpu.pipeline_mode<synchronous>, transform_indices = @transform_1, window_bounds = array<i64: 128, 256>}, {pipeline_mode = #tpu.pipeline_mode<synchronous>, transform_indices = @transform_2, window_bounds = array<i64: 1, 256>}, {pipeline_mode = #tpu.pipeline_mode<synchronous>, transform_indices = @transform_3, window_bounds = array<i64: 1, 256, 256>}, {pipeline_mode = #tpu.pipeline_mode<synchronous>, transform_indices = @transform_4, window_bounds = array<i64: 1, 256>}, {pipeline_mode = #tpu.pipeline_mode<synchronous>, transform_indices = @transform_5, window_bounds = array<i64: 256, 128>}, {pipeline_mode = #tpu.pipeline_mode<synchronous>, transform_indices = @transform_6, window_bounds = array<i64: 1, 128>}, {transform_indices = @transform_7, window_bounds = array<i64: 8, 128>}]} {
    %c0 = arith.constant 0 : index
    %c0_0 = arith.constant 0 : index
    %0 = vector.load %arg1[%c0, %c0_0] : memref<8x128xbf16, #tpu.memory_space<vmem>>, vector<8x128xbf16>
    %c0_1 = arith.constant 0 : index
    %c0_2 = arith.constant 0 : index
    %1 = vector.load %arg2[%c0_1, %c0_2] : memref<128x256xbf16, #tpu.memory_space<vmem>>, vector<128x256xbf16>
    %cst = arith.constant dense<0.000000e+00> : vector<8x256xf32>
    %2 = tpu.matmul %0, %1, %cst {dimension_numbers = #tpu.dot_dimension_numbers<[1], [0], [0], [1], [0, 0, 1, 1], [], []>} : vector<8x128xbf16>, vector<128x256xbf16>, vector<8x256xf32> -> vector<8x256xf32>
    %c0_3 = arith.constant 0 : index
    %c0_4 = arith.constant 0 : index
    %3 = vector.load %arg3[%c0_3, %c0_4] : memref<1x256xf32, #tpu.memory_space<vmem>>, vector<1x256xf32>
    %4 = vector.broadcast %3 : vector<1x256xf32> to vector<8x256xf32>
    %5 = arith.addf %2, %4 : vector<8x256xf32>
    %cst_5 = arith.constant 0.000000e+00 : f32
    %6 = vector.broadcast %cst_5 : f32 to vector<8x256xf32>
    %7 = arith.maximumf %5, %6 : vector<8x256xf32>
    %8 = arith.truncf %7 : vector<8x256xf32> to vector<8x256xbf16>
    %c0_6 = arith.constant 0 : index
    %c0_7 = arith.constant 0 : index
    %c0_8 = arith.constant 0 : index
    %9 = vector.load %arg4[%c0_6, %c0_7, %c0_8] : memref<1x256x256xbf16, #tpu.memory_space<vmem>>, vector<1x256x256xbf16>
    %10 = vector.shape_cast %9 : vector<1x256x256xbf16> to vector<256x256xbf16>
    %cst_9 = arith.constant dense<0.000000e+00> : vector<8x256xf32>
    %11 = tpu.matmul %8, %10, %cst_9 {dimension_numbers = #tpu.dot_dimension_numbers<[1], [0], [0], [1], [0, 0, 1, 1], [], []>} : vector<8x256xbf16>, vector<256x256xbf16>, vector<8x256xf32> -> vector<8x256xf32>
    %c0_10 = arith.constant 0 : index
    %c0_11 = arith.constant 0 : index
    %12 = vector.load %arg5[%c0_10, %c0_11] : memref<1x256xf32, #tpu.memory_space<vmem>>, vector<1x256xf32>
    %13 = vector.broadcast %12 : vector<1x256xf32> to vector<8x256xf32>
    %14 = arith.addf %11, %13 : vector<8x256xf32>
    %cst_12 = arith.constant 0.000000e+00 : f32
    %15 = vector.broadcast %cst_12 : f32 to vector<8x256xf32>
    %16 = arith.maximumf %14, %15 : vector<8x256xf32>
    %17 = arith.truncf %16 : vector<8x256xf32> to vector<8x256xbf16>
    %c0_13 = arith.constant 0 : index
    %c0_14 = arith.constant 0 : index
    %18 = vector.load %arg6[%c0_13, %c0_14] : memref<256x128xbf16, #tpu.memory_space<vmem>>, vector<256x128xbf16>
    %cst_15 = arith.constant dense<0.000000e+00> : vector<8x128xf32>
    %19 = tpu.matmul %17, %18, %cst_15 {dimension_numbers = #tpu.dot_dimension_numbers<[1], [0], [0], [1], [0, 0, 1, 1], [], []>} : vector<8x256xbf16>, vector<256x128xbf16>, vector<8x128xf32> -> vector<8x128xf32>
    %c0_16 = arith.constant 0 : index
    %c0_17 = arith.constant 0 : index
    %20 = vector.load %arg7[%c0_16, %c0_17] : memref<1x128xf32, #tpu.memory_space<vmem>>, vector<1x128xf32>
    %21 = vector.broadcast %20 : vector<1x128xf32> to vector<8x128xf32>
    %22 = arith.addf %19, %21 : vector<8x128xf32>
    %c0_18 = arith.constant 0 : index
    %c0_19 = arith.constant 0 : index
    %23 = vector.load %arg8[%c0_18, %c0_19] : memref<8x128xf32, #tpu.memory_space<vmem>>, vector<8x128xf32>
    tpu.vector_store %arg8[%c0_18, %c0_19], %22 {strides = array<i32>} : memref<8x128xf32, #tpu.memory_space<vmem>>, vector<8x128xf32>,
    return
  }
  func.func @transform_0(%arg0: i32) -> (i32, i32) {
    %c0_i32 = arith.constant 0 : i32
    %c0_i32_0 = arith.constant 0 : i32
    return %arg0, %c0_i32 : i32, i32
  }
  func.func @transform_1(%arg0: i32) -> (i32, i32) {
    %c0_i32 = arith.constant 0 : i32
    %c0_i32_0 = arith.constant 0 : i32
    %c0_i32_1 = arith.constant 0 : i32
    return %c0_i32, %c0_i32_0 : i32, i32
  }
  func.func @transform_2(%arg0: i32) -> (i32, i32) {
    %c0_i32 = arith.constant 0 : i32
    %c0_i32_0 = arith.constant 0 : i32
    %c0_i32_1 = arith.constant 0 : i32
    return %c0_i32, %c0_i32_0 : i32, i32
  }
  func.func @transform_3(%arg0: i32) -> (i32, i32, i32) {
    %c0_i32 = arith.constant 0 : i32
    %c0_i32_0 = arith.constant 0 : i32
    %c0_i32_1 = arith.constant 0 : i32
    %c0_i32_2 = arith.constant 0 : i32
    return %c0_i32, %c0_i32_0, %c0_i32_1 : i32, i32, i32
  }
  func.func @transform_4(%arg0: i32) -> (i32, i32) {
    %c0_i32 = arith.constant 0 : i32
    %c0_i32_0 = arith.constant 0 : i32
    %c0_i32_1 = arith.constant 0 : i32
    return %c0_i32, %c0_i32_0 : i32, i32
  }
  func.func @transform_5(%arg0: i32) -> (i32, i32) {
    %c0_i32 = arith.constant 0 : i32
    %c0_i32_0 = arith.constant 0 : i32
    %c0_i32_1 = arith.constant 0 : i32
    return %c0_i32, %c0_i32_0 : i32, i32
  }
  func.func @transform_6(%arg0: i32) -> (i32, i32) {
    %c0_i32 = arith.constant 0 : i32
    %c0_i32_0 = arith.constant 0 : i32
    %c0_i32_1 = arith.constant 0 : i32
    return %c0_i32, %c0_i32_0 : i32, i32
  }
  func.func @transform_7(%arg0: i32) -> (i32, i32) {
    %c0_i32 = arith.constant 0 : i32
    %c0_i32_0 = arith.constant 0 : i32
    return %arg0, %c0_i32 : i32, i32
  }
}

</mosaic_0001>

<llo_original>
// kernel: _lambda_.1
$region0: #{_lambda_.1}
  #allocation0 [shape = 'u32[]', space=smem, size = 0x4, offset = 0x4, fixed_abs, tag = 'smem constant byte address 0x4 - core index']
  #allocation1 [shape = 'u32[72,128]{1,0:T(1,128)}', space=vmem, size = 0x9000, scoped, tag = 'internal scratch']
  %s0 = inlined_call_operand.vmem [shape: bf16[8,128], index: 0, kind: input, shape index: {}]
  %s1 = inlined_call_operand.hbm [shape: bf16[128,256], index: 1, kind: input, shape index: {}]
  %s2 = inlined_call_operand.vmem [shape: f32[1,256], index: 2, kind: input, shape index: {}]
  %s3 = inlined_call_operand.hbm [shape: bf16[1,256,256], index: 3, kind: input, shape index: {}]
  %s4 = inlined_call_operand.vmem [shape: f32[1,256], index: 4, kind: input, shape index: {}]
  %s5 = inlined_call_operand.vmem [shape: bf16[256,128], index: 5, kind: input, shape index: {}]
  %s6 = inlined_call_operand.vmem [shape: f32[1,128], index: 6, kind: input, shape index: {}]
  %s7 = inlined_call_operand.hbm [shape: f32[8,128], index: 7, kind: output, shape index: {}]
  %s8 = sld [smem:[#allocation0]]
  $region46: #{_lambda_.1} parent=0
    _
  %s10 = ssub.s32 1, %s8
  %s11 = scalar_select 0, %s10, %s8
  $region1: #{_lambda_.1} parent=0
    #allocation2 [shape = 'u8[65536]{0}', space=vmem, size = 0x10000, scoped, tag = 'input window, operand 1, single buffered']
    #allocation3 [shape = 's32[1]{0}', space=sflag, size = 0x4, scoped, tag = 'scoped memory for _lambda_.1']
    #allocation4 [shape = 's32[1]{0}', space=sflag, size = 0x4, scoped, tag = 'scoped memory for _lambda_.1']
    #allocation5 [shape = 'u8[131072]{0}', space=vmem, size = 0x20000, scoped, tag = 'input window, operand 3, single buffered']
    #allocation6 [shape = 's32[1]{0}', space=sflag, size = 0x4, scoped, tag = 'scoped memory for _lambda_.1']
    #allocation7 [shape = 'u8[4096]{0}', space=vmem, size = 0x1000, scoped, tag = 'output window, operand 0, single buffered']
    %12 = vsyncpa [#allocation3], 0
    %13 = vsyncpa [#allocation6], 0
    %14 = vsyncpa [#allocation4], 0
    // Predicated region
    $region2: #{_lambda_.1} parent=1 // pred_check
      _
    $region3: #{_lambda_.1} parent=1 // pred_check_branch
      %16 = sbr.rel (0) target = $region5
    $region4: #{_lambda_.1} parent=1 // pred_region
      _
    $region5: #{_lambda_.1} parent=1 // pred_fallthru
      _
    // Predicated region
    $region6: #{_lambda_.1} parent=1 // pred_check
      _
    $region7: #{_lambda_.1} parent=1 // pred_check_branch
      %18 = sbr.rel (0) target = $region9
    $region8: #{_lambda_.1} parent=1 // pred_region
      %20 = vsyncadd [#allocation3], 0
      %s21 = sshll.u32 %s1, 4
      %s22 = int_to_ptr.hbm [resolvable:$true] %s21
      %s23 = sshll.u32 [#allocation2], 4
      %s24 = int_to_ptr.vmem [resolvable:$true] %s23
      %29 = dma.hbm_to_vmem [thread:$0]  %s22, 2048, %s24, [#allocation3], 128, 128, 8
    $region9: #{_lambda_.1} parent=1 // pred_fallthru
      _
    // Predicated region
    $region10: #{_lambda_.1} parent=1 // pred_check
      _
    $region11: #{_lambda_.1} parent=1 // pred_check_branch
      %31 = sbr.rel (0) target = $region13
    $region12: #{_lambda_.1} parent=1 // pred_region
      _
    $region13: #{_lambda_.1} parent=1 // pred_fallthru
      _
    // Predicated region
    $region14: #{_lambda_.1} parent=1 // pred_check
      _
    $region15: #{_lambda_.1} parent=1 // pred_check_branch
      %33 = sbr.rel (0) target = $region17
    $region16: #{_lambda_.1} parent=1 // pred_region
      %35 = vsyncadd [#allocation6], 0
      %s36 = sshll.u32 %s3, 4
      %s37 = int_to_ptr.hbm [resolvable:$true] %s36
      %s38 = sshll.u32 [#allocation5], 4
      %s39 = int_to_ptr.vmem [resolvable:$true] %s38
      %44 = dma.hbm_to_vmem [thread:$0]  %s37, 4096, %s39, [#allocation6], 128, 128, 8
    $region17: #{_lambda_.1} parent=1 // pred_fallthru
      _
    // Predicated region
    $region18: #{_lambda_.1} parent=1 // pred_check
      _
    $region19: #{_lambda_.1} parent=1 // pred_check_branch
      %46 = sbr.rel (0) target = $region21
    $region20: #{_lambda_.1} parent=1 // pred_region
      _
    $region21: #{_lambda_.1} parent=1 // pred_fallthru
      _
    // Predicated region
    $region22: #{_lambda_.1} parent=1 // pred_check
      _
    $region23: #{_lambda_.1} parent=1 // pred_check_branch
      %48 = sbr.rel (0) target = $region25
    $region24: #{_lambda_.1} parent=1 // pred_region
      _
    $region25: #{_lambda_.1} parent=1 // pred_fallthru
      _
    // Predicated region
    $region26: #{_lambda_.1} parent=1 // pred_check
      _
    $region27: #{_lambda_.1} parent=1 // pred_check_branch
      %50 = sbr.rel (0) target = $region29
    $region28: #{_lambda_.1} parent=1 // pred_region
      _
    $region29: #{_lambda_.1} parent=1 // pred_fallthru
      _
    // Predicated region
    $region30: #{_lambda_.1} parent=1 // pred_check
      _
    $region31: #{_lambda_.1} parent=1 // pred_check_branch
      %52 = sbr.rel (0) target = $region33
    $region32: #{_lambda_.1} parent=1 // pred_region
      %54 = dma.done [#allocation3], 2048
    $region33: #{_lambda_.1} parent=1 // pred_fallthru
      _
    // Predicated region
    $region34: #{_lambda_.1} parent=1 // pred_check
      _
    $region35: #{_lambda_.1} parent=1 // pred_check_branch
      %56 = sbr.rel (0) target = $region37
    $region36: #{_lambda_.1} parent=1 // pred_region
      %58 = dma.done [#allocation6], 4096
    $region37: #{_lambda_.1} parent=1 // pred_fallthru
      _
    %v59 = vld [vmem:[%s0] sm:$0xf]
    %v60 = vld [vmem:[#allocation2] sm:$0xff]
    %v61 = vld [vmem:[#allocation2 + $0x8] sm:$0xff]
    %v62 = vld [vmem:[#allocation2 + $0x10] sm:$0xff]
    %v63 = vld [vmem:[#allocation2 + $0x18] sm:$0xff]
    %v64 = vld [vmem:[#allocation2 + $0x20] sm:$0xff]
    %v65 = vld [vmem:[#allocation2 + $0x28] sm:$0xff]
    %v66 = vld [vmem:[#allocation2 + $0x30] sm:$0xff]
    %v67 = vld [vmem:[#allocation2 + $0x38] sm:$0xff]
    %v68 = vld [vmem:[#allocation2 + $0x40] sm:$0xff]
    %v69 = vld [vmem:[#allocation2 + $0x48] sm:$0xff]
    %v70 = vld [vmem:[#allocation2 + $0x50] sm:$0xff]
    %v71 = vld [vmem:[#allocation2 + $0x58] sm:$0xff]
    %v72 = vld [vmem:[#allocation2 + $0x60] sm:$0xff]
    %v73 = vld [vmem:[#allocation2 + $0x68] sm:$0xff]
    %v74 = vld [vmem:[#allocation2 + $0x70] sm:$0xff]
    %v75 = vld [vmem:[#allocation2 + $0x78] sm:$0xff]
    %v76 = vld [vmem:[%s2] sm:$0x3]
    %v78 = vperm.slane %v76, 0
    %v79 = vperm.slane %v76, 1
    %v98 = vunpack.c.l.b16 %v60
    %v99 = vunpack.c.h.b16 %v60
    %v100 = vunpack.c.l.b16 %v61
    %v101 = vunpack.c.h.b16 %v61
    %v102 = vunpack.c.l.b16 %v62
    %v103 = vunpack.c.h.b16 %v62
    %v104 = vunpack.c.l.b16 %v63
    %v105 = vunpack.c.h.b16 %v63
    %v106 = vunpack.c.l.b16 %v64
    %v107 = vunpack.c.h.b16 %v64
    %v108 = vunpack.c.l.b16 %v65
    %v109 = vunpack.c.h.b16 %v65
    %v110 = vunpack.c.l.b16 %v66
    %v111 = vunpack.c.h.b16 %v66
    %v112 = vunpack.c.l.b16 %v67
    %v113 = vunpack.c.h.b16 %v67
    %v114 = vunpack.c.l.b16 %v68
    %v115 = vunpack.c.h.b16 %v68
    %v116 = vunpack.c.l.b16 %v69
    %v117 = vunpack.c.h.b16 %v69
    %v118 = vunpack.c.l.b16 %v70
    %v119 = vunpack.c.h.b16 %v70
    %v120 = vunpack.c.l.b16 %v71
    %v121 = vunpack.c.h.b16 %v71
    %v122 = vunpack.c.l.b16 %v72
    %v123 = vunpack.c.h.b16 %v72
    %v124 = vunpack.c.l.b16 %v73
    %v125 = vunpack.c.h.b16 %v73
    %v126 = vunpack.c.l.b16 %v74
    %v127 = vunpack.c.h.b16 %v74
    %v128 = vunpack.c.l.b16 %v75
    %v129 = vunpack.c.h.b16 %v75
    %v130 = vpack.c.b16 %v100, %v98
    %v131 = vpack.c.b16 %v101, %v99
    %v132 = vpack.c.b16 %v104, %v102
    %v133 = vpack.c.b16 %v105, %v103
    %v134 = vpack.c.b16 %v108, %v106
    %v135 = vpack.c.b16 %v109, %v107
    %v136 = vpack.c.b16 %v112, %v110
    %v137 = vpack.c.b16 %v113, %v111
    %v138 = vpack.c.b16 %v116, %v114
    %v139 = vpack.c.b16 %v117, %v115
    %v140 = vpack.c.b16 %v120, %v118
    %v141 = vpack.c.b16 %v121, %v119
    %v142 = vpack.c.b16 %v124, %v122
    %v143 = vpack.c.b16 %v125, %v123
    %v144 = vpack.c.b16 %v128, %v126
    %v145 = vpack.c.b16 %v129, %v127
    %162 = vmatpush.bf16.msra.mxu0 %v144
    %163 = vmatpush.bf16.msra.mxu0 %v142
    %164 = vmatpush.bf16.msra.mxu0 %v140
    %165 = vmatpush.bf16.msra.mxu0 %v138
    %166 = vmatpush.bf16.msra.mxu0 %v136
    %167 = vmatpush.bf16.msra.mxu0 %v134
    %168 = vmatpush.bf16.msra.mxu0 %v132
    %169 = vmatpush.bf16.msra.mxu0 %v130
    %170 = vmatmul.bf16.gmra.mxu0 %v59
    %v171 = vpop.f32.mrf.mxu0
    %v172 = vadd.f32 %v78, %v171
    %v173 = vpop.f32.mrf.mxu0
    %174 = vdwg.mxu0
    %175 = vmatpush.bf16.msra.mxu0 %v145
    %176 = vmatpush.bf16.msra.mxu0 %v143
    %177 = vmatpush.bf16.msra.mxu0 %v141
    %178 = vmatpush.bf16.msra.mxu0 %v139
    %179 = vmatpush.bf16.msra.mxu0 %v137
    %180 = vmatpush.bf16.msra.mxu0 %v135
    %181 = vmatpush.bf16.msra.mxu0 %v133
    %182 = vmatpush.bf16.msra.mxu0 %v131
    %183 = vmatmul.bf16.gmra.mxu0 %v59
    %v184 = vpop.f32.mrf.mxu0
    %v185 = vadd.f32 %v79, %v184
    %v186 = vpop.f32.mrf.mxu0
    %187 = vdwg.mxu0
    %v188 = vmax.f32 %v172, 0.0
    %v189 = vmax.f32 %v185, 0.0
    %v190 = vpack.c.bf16 %v188, %v188
    %v191 = vpack.c.bf16 %v189, %v189
    %v192 = vld [vmem:[#allocation5] sm:$0xff]
    %v193 = vld [vmem:[#allocation5 + $0x8] sm:$0xff]
    %v194 = vld [vmem:[#allocation5 + $0x10] sm:$0xff]
    %v195 = vld [vmem:[#allocation5 + $0x18] sm:$0xff]
    %v196 = vld [vmem:[#allocation5 + $0x20] sm:$0xff]
    %v197 = vld [vmem:[#allocation5 + $0x28] sm:$0xff]
    %v198 = vld [vmem:[#allocation5 + $0x30] sm:$0xff]
    %v199 = vld [vmem:[#allocation5 + $0x38] sm:$0xff]
    %v200 = vld [vmem:[#allocation5 + $0x40] sm:$0xff]
    %v201 = vld [vmem:[#allocation5 + $0x48] sm:$0xff]
    %v202 = vld [vmem:[#allocation5 + $0x50] sm:$0xff]
    %v203 = vld [vmem:[#allocation5 + $0x58] sm:$0xff]
    %v204 = vld [vmem:[#allocation5 + $0x60] sm:$0xff]
    %v205 = vld [vmem:[#allocation5 + $0x68] sm:$0xff]
    %v206 = vld [vmem:[#allocation5 + $0x70] sm:$0xff]
    %v207 = vld [vmem:[#allocation5 + $0x78] sm:$0xff]
    %v208 = vld [vmem:[#allocation5 + $0x80] sm:$0xff]
    %v209 = vld [vmem:[#allocation5 + $0x88] sm:$0xff]
    %v210 = vld [vmem:[#allocation5 + $0x90] sm:$0xff]
    %v211 = vld [vmem:[#allocation5 + $0x98] sm:$0xff]
    %v212 = vld [vmem:[#allocation5 + $0xa0] sm:$0xff]
    %v213 = vld [vmem:[#allocation5 + $0xa8] sm:$0xff]
    %v214 = vld [vmem:[#allocation5 + $0xb0] sm:$0xff]
    %v215 = vld [vmem:[#allocation5 + $0xb8] sm:$0xff]
    %v216 = vld [vmem:[#allocation5 + $0xc0] sm:$0xff]
    %v217 = vld [vmem:[#allocation5 + $0xc8] sm:$0xff]
    %v218 = vld [vmem:[#allocation5 + $0xd0] sm:$0xff]
    %v219 = vld [vmem:[#allocation5 + $0xd8] sm:$0xff]
    %v220 = vld [vmem:[#allocation5 + $0xe0] sm:$0xff]
    %v221 = vld [vmem:[#allocation5 + $0xe8] sm:$0xff]
    %v222 = vld [vmem:[#allocation5 + $0xf0] sm:$0xff]
    %v223 = vld [vmem:[#allocation5 + $0xf8] sm:$0xff]
    %v224 = vld [vmem:[%s4] sm:$0x3]
    %v226 = vperm.slane %v224, 0
    %v227 = vperm.slane %v224, 1
    %v262 = vunpack.c.l.b16 %v192
    %v263 = vunpack.c.h.b16 %v192
    %v264 = vunpack.c.l.b16 %v193
    %v265 = vunpack.c.h.b16 %v193
    %v266 = vunpack.c.l.b16 %v194
    %v267 = vunpack.c.h.b16 %v194
    %v268 = vunpack.c.l.b16 %v195
    %v269 = vunpack.c.h.b16 %v195
    %v270 = vunpack.c.l.b16 %v196
    %v271 = vunpack.c.h.b16 %v196
    %v272 = vunpack.c.l.b16 %v197
    %v273 = vunpack.c.h.b16 %v197
    %v274 = vunpack.c.l.b16 %v198
    %v275 = vunpack.c.h.b16 %v198
    %v276 = vunpack.c.l.b16 %v199
    %v277 = vunpack.c.h.b16 %v199
    %v278 = vunpack.c.l.b16 %v200
    %v279 = vunpack.c.h.b16 %v200
    %v280 = vunpack.c.l.b16 %v201
    %v281 = vunpack.c.h.b16 %v201
    %v282 = vunpack.c.l.b16 %v202
    %v283 = vunpack.c.h.b16 %v202
    %v284 = vunpack.c.l.b16 %v203
    %v285 = vunpack.c.h.b16 %v203
    %v286 = vunpack.c.l.b16 %v204
    %v287 = vunpack.c.h.b16 %v204
    %v288 = vunpack.c.l.b16 %v205
    %v289 = vunpack.c.h.b16 %v205
    %v290 = vunpack.c.l.b16 %v206
    %v291 = vunpack.c.h.b16 %v206
    %v292 = vunpack.c.l.b16 %v207
    %v293 = vunpack.c.h.b16 %v207
    %v294 = vunpack.c.l.b16 %v208
    %v295 = vunpack.c.h.b16 %v208
    %v296 = vunpack.c.l.b16 %v209
    %v297 = vunpack.c.h.b16 %v209
    %v298 = vunpack.c.l.b16 %v210
    %v299 = vunpack.c.h.b16 %v210
    %v300 = vunpack.c.l.b16 %v211
    %v301 = vunpack.c.h.b16 %v211
    %v302 = vunpack.c.l.b16 %v212
    %v303 = vunpack.c.h.b16 %v212
    %v304 = vunpack.c.l.b16 %v213
    %v305 = vunpack.c.h.b16 %v213
    %v306 = vunpack.c.l.b16 %v214
    %v307 = vunpack.c.h.b16 %v214
    %v308 = vunpack.c.l.b16 %v215
    %v309 = vunpack.c.h.b16 %v215
    %v310 = vunpack.c.l.b16 %v216
    %v311 = vunpack.c.h.b16 %v216
    %v312 = vunpack.c.l.b16 %v217
    %v313 = vunpack.c.h.b16 %v217
    %v314 = vunpack.c.l.b16 %v218
    %v315 = vunpack.c.h.b16 %v218
    %v316 = vunpack.c.l.b16 %v219
    %v317 = vunpack.c.h.b16 %v219
    %v318 = vunpack.c.l.b16 %v220
    %v319 = vunpack.c.h.b16 %v220
    %v320 = vunpack.c.l.b16 %v221
    %v321 = vunpack.c.h.b16 %v221
    %v322 = vunpack.c.l.b16 %v222
    %v323 = vunpack.c.h.b16 %v222
    %v324 = vunpack.c.l.b16 %v223
    %v325 = vunpack.c.h.b16 %v223
    %v326 = vpack.c.b16 %v264, %v262
    %v327 = vpack.c.b16 %v265, %v263
    %v328 = vpack.c.b16 %v268, %v266
    %v329 = vpack.c.b16 %v269, %v267
    %v330 = vpack.c.b16 %v272, %v270
    %v331 = vpack.c.b16 %v273, %v271
    %v332 = vpack.c.b16 %v276, %v274
    %v333 = vpack.c.b16 %v277, %v275
    %v334 = vpack.c.b16 %v280, %v278
    %v335 = vpack.c.b16 %v281, %v279
    %v336 = vpack.c.b16 %v284, %v282
    %v337 = vpack.c.b16 %v285, %v283
    %v338 = vpack.c.b16 %v288, %v286
    %v339 = vpack.c.b16 %v289, %v287
    %v340 = vpack.c.b16 %v292, %v290
    %v341 = vpack.c.b16 %v293, %v291
    %v342 = vpack.c.b16 %v296, %v294
    %v343 = vpack.c.b16 %v297, %v295
    %v344 = vpack.c.b16 %v300, %v298
    %v345 = vpack.c.b16 %v301, %v299
    %v346 = vpack.c.b16 %v304, %v302
    %v347 = vpack.c.b16 %v305, %v303
    %v348 = vpack.c.b16 %v308, %v306
    %v349 = vpack.c.b16 %v309, %v307
    %v350 = vpack.c.b16 %v312, %v310
    %v351 = vpack.c.b16 %v313, %v311
    %v352 = vpack.c.b16 %v316, %v314
    %v353 = vpack.c.b16 %v317, %v315
    %v354 = vpack.c.b16 %v320, %v318
    %v355 = vpack.c.b16 %v321, %v319
    %v356 = vpack.c.b16 %v324, %v322
    %v357 = vpack.c.b16 %v325, %v323
    %390 = vmatpush.bf16.msra.mxu0 %v340
    %391 = vmatpush.bf16.msra.mxu0 %v338
    %392 = vmatpush.bf16.msra.mxu0 %v336
    %393 = vmatpush.bf16.msra.mxu0 %v334
    %394 = vmatpush.bf16.msra.mxu0 %v332
    %395 = vmatpush.bf16.msra.mxu0 %v330
    %396 = vmatpush.bf16.msra.mxu0 %v328
    %397 = vmatpush.bf16.msra.mxu0 %v326
    %398 = vmatmul.bf16.gmra.mxu0 %v190
    %v399 = vpop.f32.mrf.mxu0
    %v400 = vadd.f32 %v226, %v399
    %v401 = vpop.f32.mrf.mxu0
    %402 = vdwg.mxu0
    %403 = vmatpush.bf16.msra.mxu0 %v356
    %404 = vmatpush.bf16.msra.mxu0 %v354
    %405 = vmatpush.bf16.msra.mxu0 %v352
    %406 = vmatpush.bf16.msra.mxu0 %v350
    %407 = vmatpush.bf16.msra.mxu0 %v348
    %408 = vmatpush.bf16.msra.mxu0 %v346
    %409 = vmatpush.bf16.msra.mxu0 %v344
    %410 = vmatpush.bf16.msra.mxu0 %v342
    %411 = vmatmul.bf16.gmra.mxu0 %v191
    %v412 = vpop.f32.mrf.mxu0
    %v413 = vadd.f32 %v400, %v412
    %v414 = vpop.f32.mrf.mxu0
    %415 = vdwg.mxu0
    %416 = vmatpush.bf16.msra.mxu0 %v341
    %417 = vmatpush.bf16.msra.mxu0 %v339
    %418 = vmatpush.bf16.msra.mxu0 %v337
    %419 = vmatpush.bf16.msra.mxu0 %v335
    %420 = vmatpush.bf16.msra.mxu0 %v333
    %421 = vmatpush.bf16.msra.mxu0 %v331
    %422 = vmatpush.bf16.msra.mxu0 %v329
    %423 = vmatpush.bf16.msra.mxu0 %v327
    %424 = vmatmul.bf16.gmra.mxu0 %v190
    %v425 = vpop.f32.mrf.mxu0
    %v426 = vadd.f32 %v227, %v425
    %v427 = vpop.f32.mrf.mxu0
    %428 = vdwg.mxu0
    %429 = vmatpush.bf16.msra.mxu0 %v357
    %430 = vmatpush.bf16.msra.mxu0 %v355
    %431 = vmatpush.bf16.msra.mxu0 %v353
    %432 = vmatpush.bf16.msra.mxu0 %v351
    %433 = vmatpush.bf16.msra.mxu0 %v349
    %434 = vmatpush.bf16.msra.mxu0 %v347
    %435 = vmatpush.bf16.msra.mxu0 %v345
    %436 = vmatpush.bf16.msra.mxu0 %v343
    %437 = vmatmul.bf16.gmra.mxu0 %v191
    %v438 = vpop.f32.mrf.mxu0
    %v439 = vadd.f32 %v426, %v438
    %v440 = vpop.f32.mrf.mxu0
    %441 = vdwg.mxu0
    %v442 = vmax.f32 %v413, 0.0
    %v443 = vmax.f32 %v439, 0.0
    %v444 = vpack.c.bf16 %v442, %v442
    %v445 = vpack.c.bf16 %v443, %v443
    %v446 = vld [vmem:[%s5] sm:$0xf]
    %v447 = vld [vmem:[%s5 + $0x4] sm:$0xf]
    %v448 = vld [vmem:[%s5 + $0x8] sm:$0xf]
    %v449 = vld [vmem:[%s5 + $0xc] sm:$0xf]
    %v450 = vld [vmem:[%s5 + $0x10] sm:$0xf]
    %v451 = vld [vmem:[%s5 + $0x14] sm:$0xf]
    %v452 = vld [vmem:[%s5 + $0x18] sm:$0xf]
    %v453 = vld [vmem:[%s5 + $0x1c] sm:$0xf]
    %v454 = vld [vmem:[%s5 + $0x20] sm:$0xf]
    %v455 = vld [vmem:[%s5 + $0x24] sm:$0xf]
    %v456 = vld [vmem:[%s5 + $0x28] sm:$0xf]
    %v457 = vld [vmem:[%s5 + $0x2c] sm:$0xf]
    %v458 = vld [vmem:[%s5 + $0x30] sm:$0xf]
    %v459 = vld [vmem:[%s5 + $0x34] sm:$0xf]
    %v460 = vld [vmem:[%s5 + $0x38] sm:$0xf]
    %v461 = vld [vmem:[%s5 + $0x3c] sm:$0xf]
    %v462 = vld [vmem:[%s5 + $0x40] sm:$0xf]
    %v463 = vld [vmem:[%s5 + $0x44] sm:$0xf]
    %v464 = vld [vmem:[%s5 + $0x48] sm:$0xf]
    %v465 = vld [vmem:[%s5 + $0x4c] sm:$0xf]
    %v466 = vld [vmem:[%s5 + $0x50] sm:$0xf]
    %v467 = vld [vmem:[%s5 + $0x54] sm:$0xf]
    %v468 = vld [vmem:[%s5 + $0x58] sm:$0xf]
    %v469 = vld [vmem:[%s5 + $0x5c] sm:$0xf]
    %v470 = vld [vmem:[%s5 + $0x60] sm:$0xf]
    %v471 = vld [vmem:[%s5 + $0x64] sm:$0xf]
    %v472 = vld [vmem:[%s5 + $0x68] sm:$0xf]
    %v473 = vld [vmem:[%s5 + $0x6c] sm:$0xf]
    %v474 = vld [vmem:[%s5 + $0x70] sm:$0xf]
    %v475 = vld [vmem:[%s5 + $0x74] sm:$0xf]
    %v476 = vld [vmem:[%s5 + $0x78] sm:$0xf]
    %v477 = vld [vmem:[%s5 + $0x7c] sm:$0xf]
    %v478 = vld [vmem:[%s6] sm:$0x1]
    %v480 = vperm.slane %v478, 0
    %v514 = vunpack.c.l.b16 %v446
    %v515 = vunpack.c.l.b16 %v447
    %v516 = vunpack.c.l.b16 %v448
    %v517 = vunpack.c.l.b16 %v449
    %v518 = vunpack.c.l.b16 %v450
    %v519 = vunpack.c.l.b16 %v451
    %v520 = vunpack.c.l.b16 %v452
    %v521 = vunpack.c.l.b16 %v453
    %v522 = vunpack.c.l.b16 %v454
    %v523 = vunpack.c.l.b16 %v455
    %v524 = vunpack.c.l.b16 %v456
    %v525 = vunpack.c.l.b16 %v457
    %v526 = vunpack.c.l.b16 %v458
    %v527 = vunpack.c.l.b16 %v459
    %v528 = vunpack.c.l.b16 %v460
    %v529 = vunpack.c.l.b16 %v461
    %v530 = vunpack.c.l.b16 %v462
    %v531 = vunpack.c.l.b16 %v463
    %v532 = vunpack.c.l.b16 %v464
    %v533 = vunpack.c.l.b16 %v465
    %v534 = vunpack.c.l.b16 %v466
    %v535 = vunpack.c.l.b16 %v467
    %v536 = vunpack.c.l.b16 %v468
    %v537 = vunpack.c.l.b16 %v469
    %v538 = vunpack.c.l.b16 %v470
    %v539 = vunpack.c.l.b16 %v471
    %v540 = vunpack.c.l.b16 %v472
    %v541 = vunpack.c.l.b16 %v473
    %v542 = vunpack.c.l.b16 %v474
    %v543 = vunpack.c.l.b16 %v475
    %v544 = vunpack.c.l.b16 %v476
    %v545 = vunpack.c.l.b16 %v477
    %v546 = vpack.c.b16 %v515, %v514
    %v547 = vpack.c.b16 %v517, %v516
    %v548 = vpack.c.b16 %v519, %v518
    %v549 = vpack.c.b16 %v521, %v520
    %v550 = vpack.c.b16 %v523, %v522
    %v551 = vpack.c.b16 %v525, %v524
    %v552 = vpack.c.b16 %v527, %v526
    %v553 = vpack.c.b16 %v529, %v528
    %v554 = vpack.c.b16 %v531, %v530
    %v555 = vpack.c.b16 %v533, %v532
    %v556 = vpack.c.b16 %v535, %v534
    %v557 = vpack.c.b16 %v537, %v536
    %v558 = vpack.c.b16 %v539, %v538
    %v559 = vpack.c.b16 %v541, %v540
    %v560 = vpack.c.b16 %v543, %v542
    %v561 = vpack.c.b16 %v545, %v544
    %578 = vmatpush.bf16.msra.mxu0 %v553
    %579 = vmatpush.bf16.msra.mxu0 %v552
    %580 = vmatpush.bf16.msra.mxu0 %v551
    %581 = vmatpush.bf16.msra.mxu0 %v550
    %582 = vmatpush.bf16.msra.mxu0 %v549
    %583 = vmatpush.bf16.msra.mxu0 %v548
    %584 = vmatpush.bf16.msra.mxu0 %v547
    %585 = vmatpush.bf16.msra.mxu0 %v546
    %586 = vmatmul.bf16.gmra.mxu0 %v444
    %v587 = vpop.f32.mrf.mxu0
    %v588 = vadd.f32 %v480, %v587
    %v589 = vpop.f32.mrf.mxu0
    %590 = vdwg.mxu0
    %591 = vmatpush.bf16.msra.mxu0 %v561
    %592 = vmatpush.bf16.msra.mxu0 %v560
    %593 = vmatpush.bf16.msra.mxu0 %v559
    %594 = vmatpush.bf16.msra.mxu0 %v558
    %595 = vmatpush.bf16.msra.mxu0 %v557
    %596 = vmatpush.bf16.msra.mxu0 %v556
    %597 = vmatpush.bf16.msra.mxu0 %v555
    %598 = vmatpush.bf16.msra.mxu0 %v554
    %599 = vmatmul.bf16.gmra.mxu0 %v445
    %v600 = vpop.f32.mrf.mxu0
    %v601 = vadd.f32 %v588, %v600
    %v602 = vpop.f32.mrf.mxu0
    %603 = vdwg.mxu0
    %604 = vst [vmem:[#allocation7] sm:$0xff] %v601
    // Predicated region
    $region38: #{_lambda_.1} parent=1 // pred_check
      _
    $region39: #{_lambda_.1} parent=1 // pred_check_branch
      %606 = sbr.rel (0) target = $region41
    $region40: #{_lambda_.1} parent=1 // pred_region
      %608 = vsyncadd [#allocation4], 0
      %s610 = sshll.u32 [#allocation7], 4
      %s611 = int_to_ptr.vmem [resolvable:$true] %s610
      %s612 = sshll.u32 %s7, 4
      %s613 = int_to_ptr.hbm [resolvable:$true] %s612
      %615 = dma.vmem_to_hbm [thread:$0]  %s611, 128, %s613, [#allocation4]
    $region41: #{_lambda_.1} parent=1 // pred_fallthru
      _
    // Predicated region
    $region42: #{_lambda_.1} parent=1 // pred_check
      _
    $region43: #{_lambda_.1} parent=1 // pred_check_branch
      %617 = sbr.rel (0) target = $region45
    $region44: #{_lambda_.1} parent=1 // pred_region
      %619 = dma.done [#allocation4], 128
    $region45: #{_lambda_.1} parent=1 // pred_fallthru
      _
    %620 = vsyncpa [#allocation3], 1
    %621 = vsyncpa [#allocation6], 1
    %622 = vsyncpa [#allocation4], 1

</llo_original>
